<compile_context>
chip_gen: v7x
topology: tpu7x:2x2x1
jax: 0.10.0
libtpu: 0.0.40
codegen_flags: <defaults>
</compile_context>

<pallas_src>
import functools

import jax
import jax.numpy as jnp
from jax import lax
from jax.experimental import pallas as pl
from jax.experimental.pallas import tpu as pltpu


# ----------------------------- Pallas kernel --------------------------------
def _tcn_block_kernel(x_ref, w1f_ref, b1f_ref, w2_ref, b2_ref, out_ref, *,
                      K, d, L, LT, C_out, neg_slope, mxu_dtype):
    """One lane-tile (B_TILE batch elements flattened onto lanes) per grid step.

    x_ref   : (C_in,  LT)          LT = B_TILE * L, batch folded onto lanes
    w1f_ref : (2*C_out, K*C_in)    [conv1 tap-stacked ; 1x1 downsample in shift-0 tap]
    b1f_ref : (2*C_out, 1)         [b1 ; b_ds]  (f32)
    w2_ref  : (C_out, K*C_out)     tap-stacked conv2 weight
    b2_ref  : (C_out, 1)           f32
    out_ref : (C_out, LT)
    """
    x = x_ref[...]                                           # (C_in, LT) f32

    # ---- hoisted causal-mask setup (shared by both causal stacks) ----------
    shifts = [(K - 1 - k) * d for k in range(K)]             # tap k -> right-shift
    pos = lax.broadcasted_iota(jnp.int32, (1, LT), 1) % L    # position within each L
    masks = {s: (pos >= s) for s in shifts if s > 0}         # (K-1) masks, computed once

    def causal_stack(v):
        """v: (C, LT) -> (K*C, LT). Tap-k block = v shifted right by (K-1-k)*d
        lanes (pltpu.roll, XLU) with the wrapped-in causal head zeroed."""
        parts = []
        for s in shifts:
            if s == 0:
                parts.append(v)
            else:
                r = pltpu.roll(v, shift=s, axis=1)
                parts.append(jnp.where(masks[s], r, 0.0))
        return jnp.concatenate(parts, axis=0)

    # ---- conv1 (dilated causal) + 1x1 downsample: ONE fused MXU matmul -----
    xs = causal_stack(x)                                     # (K*C_in, LT)
    if mxu_dtype != jnp.float32:
        xs = xs.astype(mxu_dtype)
    fused = jnp.dot(w1f_ref[...], xs,
                    preferred_element_type=jnp.float32) + b1f_ref[...]
    acc1 = fused[:C_out, :]                                  # conv1 pre-activation
    res = fused[C_out:, :]                                   # downsample (residual) path
    h1 = jnp.where(acc1 > 0, acc1, neg_slope * acc1)         # LeakyReLU(0.2)
    # dropout1: identity (eval mode)

    # ---- conv2 (dilated causal) on h1 ---------------------------------------
    hs = causal_stack(h1)                                    # (K*C_out, LT)
    if mxu_dtype != jnp.float32:
        hs = hs.astype(mxu_dtype)
    acc2 = jnp.dot(w2_ref[...], hs,
                   preferred_element_type=jnp.float32) + b2_ref[...]
    h2 = jnp.where(acc2 > 0, acc2, neg_slope * acc2)         # LeakyReLU(0.2)
    # dropout2: identity (eval mode)

    # ---- residual add + ReLU -------------------------------------------------
    out_ref[...] = jnp.maximum(h2 + res, 0.0).astype(out_ref.dtype)


# ------------------------------ wrapper --------------------------------------
def _weight_norm(v, g):
    """PyTorch nn.utils.weight_norm (dim=0): w = g * v / ||v||, norm over (in, k)."""
    norm = jnp.sqrt(jnp.sum(v * v, axis=(1, 2), keepdims=True))
    return v * (g.reshape(-1, 1, 1) / norm)


def _tensorcores_per_chip():
    """v7x has 2 TensorCores/chip; v5e/v6e have 1.  Conservative fallback = 1."""
    try:
        kind = jax.devices()[0].device_kind.lower()
    except Exception:
        return 1
    return 2 if "v7" in kind else 1


def _pick_batch_tile(N, L, target_lanes, num_tc):
    """Choose B_TILE (divisor of N).  Single-TC chips: largest fitting tile
    (ideally one grid step).  Multi-TC chips: keep >= num_tc grid steps with
    >= 512-lane tiles so cores share the work.  Lane dim of each block must be
    a multiple of 128 or equal the full flat extent (BlockSpec requirement)."""
    full = N * L

    def lane_ok(b):
        lt = b * L
        return lt == full or lt % 128 == 0

    divisors = [b for b in range(1, N + 1) if N % b == 0]
    fits = [b for b in divisors if b * L <= target_lanes and lane_ok(b)]
    if not fits:
        return N                      # single full-extent step is always legal
    if num_tc >= 2:
        multi = [b for b in fits if (N // b) >= num_tc and b * L >= 512]
        if multi:
            return max(multi)
    return max(fits)


def tcn_block(x, params, *, kernel_size, dilation, padding, neg_slope=0.2,
              mxu_dtype=jnp.float32, out_dtype=jnp.float32,
              target_lanes=8192, vmem_limit_bytes=32 * 1024 * 1024):
    """x: (N, C_in, L) float32 -> (N, C_out, L) out_dtype."""
    N, C_in, L = x.shape
    K, d, p = kernel_size, dilation, padding
    assert p == (K - 1) * d, "TCN chomp assumes padding == (kernel_size-1)*dilation"
    assert p >= 1, "module chomps `padding` samples; padding must be >= 1"
    assert d >= 1 and (K - 1) * d < L, \
        "causal shift (K-1)*d must be < L for the roll+mask tap construction"

    # Effective (weight-normed) weights, tap-stacked so each conv is ONE matmul.
    # Stacked column block k multiplies x shifted right by (K-1-k)*d, matching
    # causal_stack() ordering in the kernel (shift-0 tap == last block).
    w1 = _weight_norm(params["v1"], params["g1"])            # (C_out, C_in, K)
    w2 = _weight_norm(params["v2"], params["g2"])            # (C_out, C_out, K)
    C_out = w1.shape[0]
    w1s = w1.transpose(0, 2, 1).reshape(C_out, K * C_in)
    w2s = w2.transpose(0, 2, 1).reshape(C_out, K * C_out).astype(mxu_dtype)
    wds = params["w_ds"][:, :, 0]                            # (C_out, C_in)

    # Fuse the 1x1 downsample into the conv1 matmul: place wds in the shift-0
    # tap's C_in columns (last block), zeros elsewhere.
    wds_stacked = jnp.zeros((C_out, K * C_in), jnp.float32)
    wds_stacked = wds_stacked.at[:, (K - 1) * C_in:].set(wds)
    w1f = jnp.concatenate([w1s, wds_stacked], axis=0).astype(mxu_dtype)  # (2*C_out, K*C_in)

    b1f = jnp.concatenate([params["b1"].reshape(C_out, 1),
                           params["b_ds"].reshape(C_out, 1)],
                          axis=0).astype(jnp.float32)        # (2*C_out, 1)
    b2 = params["b2"].reshape(C_out, 1).astype(jnp.float32)

    # Lane-dense layout: fold batch onto the lane axis -> (C_in, N*L).
    x_flat = jnp.transpose(x, (1, 0, 2)).reshape(C_in, N * L)

    # VMEM-aware lane-tile cap (f32 live temporaries per lane column + slack),
    # then generation-aware tile pick.
    per_lane_bytes = 4 * (K * C_in + K * C_out + C_in + 6 * C_out)
    lt_cap = max(128, ((vmem_limit_bytes // 2) // per_lane_bytes) // 128 * 128)
    num_tc = _tensorcores_per_chip()
    B_TILE = _pick_batch_tile(N, L, min(target_lanes, lt_cap), num_tc)
    LT = B_TILE * L
    assert LT == N * L or LT % 128 == 0, "lane tile must be 128-aligned or full extent"
    grid = (N // B_TILE,)

    kernel = functools.partial(_tcn_block_kernel, K=K, d=d, L=L, LT=LT,
                               C_out=C_out, neg_slope=neg_slope,
                               mxu_dtype=mxu_dtype)

    flops = 2 * N * L * (2 * C_out * K * C_in + C_out * K * C_out)
    w_bytes = (w1f.size + w2s.size) * jnp.dtype(mxu_dtype).itemsize
    bytes_accessed = int(x_flat.size * 4 + N * C_out * L * jnp.dtype(out_dtype).itemsize
                         + w_bytes + (b1f.size + b2.size) * 4)

    out_flat = pl.pallas_call(
        kernel,
        out_shape=jax.ShapeDtypeStruct((C_out, N * L), out_dtype),
        grid_spec=pltpu.PrefetchScalarGridSpec(
            num_scalar_prefetch=0,
            grid=grid,
            in_specs=[
                pl.BlockSpec((C_in, LT), lambda j: (0, j)),
                pl.BlockSpec((2 * C_out, K * C_in), lambda j: (0, 0)),
                pl.BlockSpec((2 * C_out, 1), lambda j: (0, 0)),
                pl.BlockSpec((C_out, K * C_out), lambda j: (0, 0)),
                pl.BlockSpec((C_out, 1), lambda j: (0, 0)),
            ],
            out_specs=pl.BlockSpec((C_out, LT), lambda j: (0, j)),
        ),
        compiler_params=pltpu.CompilerParams(
            dimension_semantics=("parallel",),
            vmem_limit_bytes=vmem_limit_bytes),
        cost_estimate=pl.CostEstimate(flops=flops, transcendentals=0,
                                      bytes_accessed=bytes_accessed),
    )(x_flat, w1f, b1f, w2s, b2)

    # Unfold batch from lanes: (C_out, N*L) -> (N, C_out, L).
    return jnp.transpose(out_flat.reshape(C_out, N, L), (1, 0, 2))


# ---------------------------- pure-JAX reference ------------------------------
def tcn_block_ref(x, params, *, kernel_size, dilation, padding, neg_slope=0.2):
    d, p = dilation, padding
    w1 = _weight_norm(params["v1"], params["g1"])
    w2 = _weight_norm(params["v2"], params["g2"])
    dn = ("NCH", "OIH", "NCH")

    def conv(inp, w, b, pad, dil):
        y = lax.conv_general_dilated(inp, w, window_strides=(1,), padding=[(pad, pad)],
                                     rhs_dilation=(dil,), dimension_numbers=dn)
        return y + b[None, :, None]

    h = conv(x, w1, params["b1"], p, d)[:, :, :-p]
    h = jnp.where(h > 0, h, neg_slope * h)
    h = conv(h, w2, params["b2"], p, d)[:, :, :-p]
    h = jnp.where(h > 0, h, neg_slope * h)
    ds = conv(x, params["w_ds"], params["b_ds"], 0, 1)
    return jnp.maximum(h + ds, 0.0)


# --------------------------------- main ---------------------------------------
if __name__ == "__main__":
    # Module hyper-parameters (small, consistent with a TCN residual block).
    input_dim, output_dim = 8, 16
    kernel_size, dilation = 3, 2
    padding = (kernel_size - 1) * dilation          # = 4
    N, L = 8, 128

    key = jax.random.PRNGKey(0)
    ks = jax.random.split(key, 8)

    # Deterministic synthetic parameters (shapes per nn.Conv1d / weight_norm).
    v1 = jax.random.normal(ks[0], (output_dim, input_dim, kernel_size), jnp.float32) * 0.2
    v2 = jax.random.normal(ks[1], (output_dim, output_dim, kernel_size), jnp.float32) * 0.2
    params = {
        "v1": v1,
        "g1": jnp.sqrt(jnp.sum(v1 * v1, axis=(1, 2))),   # weight_norm init: g = ||v||
        "b1": jax.random.normal(ks[2], (output_dim,), jnp.float32) * 0.1,
        "v2": v2,
        "g2": jnp.sqrt(jnp.sum(v2 * v2, axis=(1, 2))),
        "b2": jax.random.normal(ks[3], (output_dim,), jnp.float32) * 0.1,
        "w_ds": jax.random.normal(ks[4], (output_dim, input_dim, 1), jnp.float32) * 0.2,
        "b_ds": jax.random.normal(ks[5], (output_dim,), jnp.float32) * 0.1,
    }

    x = jax.random.normal(ks[6], (N, input_dim, L), jnp.float32)

    ref = tcn_block_ref(x, params, kernel_size=kernel_size, dilation=dilation,
                        padding=padding)

    # Default path: f32 MXU operands, generation-aware tiling (single grid step
    # on v5e/v6e, >=2 parallel steps on v7x).  Exact parity with the f32 module.
    out = jax.block_until_ready(
        tcn_block(x, params, kernel_size=kernel_size, dilation=dilation,
                  padding=padding))
    assert out.shape == (N, output_dim, L)
    assert jnp.allclose(out, ref, atol=1e-3, rtol=1e-3), \
        f"f32 mismatch: max abs err {jnp.max(jnp.abs(out - ref))}"

    # Also exercise the multi-step (grid > 1) tiling path explicitly.
    out_multi = jax.block_until_ready(
        tcn_block(x, params, kernel_size=kernel_size, dilation=dilation,
                  padding=padding, target_lanes=512))
    assert jnp.allclose(out_multi, ref, atol=1e-3, rtol=1e-3), \
        f"multi-step mismatch: max abs err {jnp.max(jnp.abs(out_multi - ref))}"

    print("KERNEL_OK")
</pallas_src>

<mosaic_0001>
module attributes {stable_mosaic.version = 11 : i64} {
  func.func @_tcn_block_kernel(%arg0: i32, %arg1: memref<8x1024xf32, #tpu.memory_space<vmem>>, %arg2: memref<32x24xf32, #tpu.memory_space<vmem>>, %arg3: memref<32x1xf32, #tpu.memory_space<vmem>>, %arg4: memref<16x48xf32, #tpu.memory_space<vmem>>, %arg5: memref<16x1xf32, #tpu.memory_space<vmem>>, %arg6: memref<16x1024xf32, #tpu.memory_space<vmem>>) attributes {dimension_semantics = [#tpu.dimension_semantics<parallel>], iteration_bounds = array<i64: 1>, scalar_prefetch = 0 : i64, scratch_operands = 0 : i64, tpu.core_type = #tpu.core_type<tc>, window_params = [{transform_indices = @transform_0, window_bounds = array<i64: 8, 1024>}, {pipeline_mode = #tpu.pipeline_mode<synchronous>, transform_indices = @transform_1, window_bounds = array<i64: 32, 24>}, {pipeline_mode = #tpu.pipeline_mode<synchronous>, transform_indices = @transform_2, window_bounds = array<i64: 32, 1>}, {pipeline_mode = #tpu.pipeline_mode<synchronous>, transform_indices = @transform_3, window_bounds = array<i64: 16, 48>}, {pipeline_mode = #tpu.pipeline_mode<synchronous>, transform_indices = @transform_4, window_bounds = array<i64: 16, 1>}, {transform_indices = @transform_5, window_bounds = array<i64: 16, 1024>}]} {
    %c0 = arith.constant 0 : index
    %c0_0 = arith.constant 0 : index
    %0 = vector.load %arg1[%c0, %c0_0] : memref<8x1024xf32, #tpu.memory_space<vmem>>, vector<8x1024xf32>
    %1 = tpu.iota {dimensions = array<i32: 1>} : vector<1x1024xi32>
    %c128_i32 = arith.constant 128 : i32
    %c0_i32 = arith.constant 0 : i32
    %2 = arith.cmpi eq, %c128_i32, %c0_i32 : i32
    %c1_i32 = arith.constant 1 : i32
    %3 = arith.select %2, %c1_i32, %c128_i32 : i32
    %4 = vector.broadcast %3 : i32 to vector<1x1024xi32>
    %5 = arith.remsi %1, %4 : vector<1x1024xi32>
    %c0_i32_1 = arith.constant 0 : i32
    %6 = vector.broadcast %c0_i32_1 : i32 to vector<1x1024xi32>
    %7 = arith.cmpi ne, %5, %6 : vector<1x1024xi32>
    %c0_i32_2 = arith.constant 0 : i32
    %8 = vector.broadcast %c0_i32_2 : i32 to vector<1x1024xi32>
    %9 = arith.cmpi slt, %5, %8 : vector<1x1024xi32>
    %c0_i32_3 = arith.constant 0 : i32
    %10 = arith.cmpi slt, %3, %c0_i32_3 : i32
    %11 = vector.broadcast %10 : i1 to vector<1x1024xi1>
    %12 = vector.broadcast %11 : vector<1x1024xi1> to vector<1x1024xi1>
    %13 = arith.xori %9, %12 : vector<1x1024xi1>
    %14 = arith.andi %13, %7 : vector<1x1024xi1>
    %15 = vector.broadcast %3 : i32 to vector<1x1024xi32>
    %16 = arith.addi %5, %15 : vector<1x1024xi32>
    %17 = arith.select %14, %16, %5 : vector<1x1024xi1>, vector<1x1024xi32>
    %c4_i32 = arith.constant 4 : i32
    %18 = vector.broadcast %c4_i32 : i32 to vector<1x1024xi32>
    %19 = arith.cmpi sge, %17, %18 : vector<1x1024xi32>
    %c2_i32 = arith.constant 2 : i32
    %20 = vector.broadcast %c2_i32 : i32 to vector<1x1024xi32>
    %21 = arith.cmpi sge, %17, %20 : vector<1x1024xi32>
    %c4_i32_4 = arith.constant 4 : i32
    %22 = tpu.dynamic_rotate %0 by %c4_i32_4 dim 1 : vector<8x1024xf32>, i32 -> vector<8x1024xf32>
    %cst = arith.constant 0.000000e+00 : f32
    %23 = vector.shape_cast %19 : vector<1x1024xi1> to vector<1x1024xi1>
    %24 = vector.broadcast %23 : vector<1x1024xi1> to vector<8x1024xi1>
    %25 = vector.broadcast %cst : f32 to vector<8x1024xf32>
    %26 = arith.select %24, %22, %25 : vector<8x1024xi1>, vector<8x1024xf32>
    %c2_i32_5 = arith.constant 2 : i32
    %27 = tpu.dynamic_rotate %0 by %c2_i32_5 dim 1 : vector<8x1024xf32>, i32 -> vector<8x1024xf32>
    %cst_6 = arith.constant 0.000000e+00 : f32
    %28 = vector.shape_cast %21 : vector<1x1024xi1> to vector<1x1024xi1>
    %29 = vector.broadcast %28 : vector<1x1024xi1> to vector<8x1024xi1>
    %30 = vector.broadcast %cst_6 : f32 to vector<8x1024xf32>
    %31 = arith.select %29, %27, %30 : vector<8x1024xi1>, vector<8x1024xf32>
    %32 = tpu.concatenate %26, %31, %0 in 0 : vector<8x1024xf32>, vector<8x1024xf32>, vector<8x1024xf32> -> vector<24x1024xf32>
    %c0_7 = arith.constant 0 : index
    %c0_8 = arith.constant 0 : index
    %33 = vector.load %arg2[%c0_7, %c0_8] : memref<32x24xf32, #tpu.memory_space<vmem>>, vector<32x24xf32>
    %cst_9 = arith.constant dense<0.000000e+00> : vector<32x1024xf32>
    %34 = tpu.matmul %33, %32, %cst_9 {dimension_numbers = #tpu.dot_dimension_numbers<[1], [0], [0], [1], [0, 0, 1, 1], [], []>} : vector<32x24xf32>, vector<24x1024xf32>, vector<32x1024xf32> -> vector<32x1024xf32>
    %c0_10 = arith.constant 0 : index
    %c0_11 = arith.constant 0 : index
    %35 = vector.load %arg3[%c0_10, %c0_11] : memref<32x1xf32, #tpu.memory_space<vmem>>, vector<32x1xf32>
    %36 = vector.broadcast %35 : vector<32x1xf32> to vector<32x1024xf32>
    %37 = arith.addf %34, %36 : vector<32x1024xf32>
    %38 = vector.extract_strided_slice %37 {offsets = [0, 0], sizes = [16, 1024], strides = [1, 1]} : vector<32x1024xf32> to vector<16x1024xf32>
    %39 = vector.extract_strided_slice %37 {offsets = [16, 0], sizes = [16, 1024], strides = [1, 1]} : vector<32x1024xf32> to vector<16x1024xf32>
    %cst_12 = arith.constant 0.000000e+00 : f32
    %40 = vector.broadcast %cst_12 : f32 to vector<16x1024xf32>
    %41 = arith.cmpf ogt, %38, %40 : vector<16x1024xf32>
    %cst_13 = arith.constant 2.000000e-01 : f32
    %42 = vector.broadcast %cst_13 : f32 to vector<16x1024xf32>
    %43 = arith.mulf %42, %38 : vector<16x1024xf32>
    %44 = arith.select %41, %38, %43 : vector<16x1024xi1>, vector<16x1024xf32>
    %c4_i32_14 = arith.constant 4 : i32
    %45 = tpu.dynamic_rotate %44 by %c4_i32_14 dim 1 : vector<16x1024xf32>, i32 -> vector<16x1024xf32>
    %cst_15 = arith.constant 0.000000e+00 : f32
    %46 = vector.shape_cast %19 : vector<1x1024xi1> to vector<1x1024xi1>
    %47 = vector.broadcast %46 : vector<1x1024xi1> to vector<16x1024xi1>
    %48 = vector.broadcast %cst_15 : f32 to vector<16x1024xf32>
    %49 = arith.select %47, %45, %48 : vector<16x1024xi1>, vector<16x1024xf32>
    %c2_i32_16 = arith.constant 2 : i32
    %50 = tpu.dynamic_rotate %44 by %c2_i32_16 dim 1 : vector<16x1024xf32>, i32 -> vector<16x1024xf32>
    %cst_17 = arith.constant 0.000000e+00 : f32
    %51 = vector.shape_cast %21 : vector<1x1024xi1> to vector<1x1024xi1>
    %52 = vector.broadcast %51 : vector<1x1024xi1> to vector<16x1024xi1>
    %53 = vector.broadcast %cst_17 : f32 to vector<16x1024xf32>
    %54 = arith.select %52, %50, %53 : vector<16x1024xi1>, vector<16x1024xf32>
    %55 = tpu.concatenate %49, %54, %44 in 0 : vector<16x1024xf32>, vector<16x1024xf32>, vector<16x1024xf32> -> vector<48x1024xf32>
    %c0_18 = arith.constant 0 : index
    %c0_19 = arith.constant 0 : index
    %56 = vector.load %arg4[%c0_18, %c0_19] : memref<16x48xf32, #tpu.memory_space<vmem>>, vector<16x48xf32>
    %cst_20 = arith.constant dense<0.000000e+00> : vector<16x1024xf32>
    %57 = tpu.matmul %56, %55, %cst_20 {dimension_numbers = #tpu.dot_dimension_numbers<[1], [0], [0], [1], [0, 0, 1, 1], [], []>} : vector<16x48xf32>, vector<48x1024xf32>, vector<16x1024xf32> -> vector<16x1024xf32>
    %c0_21 = arith.constant 0 : index
    %c0_22 = arith.constant 0 : index
    %58 = vector.load %arg5[%c0_21, %c0_22] : memref<16x1xf32, #tpu.memory_space<vmem>>, vector<16x1xf32>
    %59 = vector.broadcast %58 : vector<16x1xf32> to vector<16x1024xf32>
    %60 = arith.addf %57, %59 : vector<16x1024xf32>
    %cst_23 = arith.constant 0.000000e+00 : f32
    %61 = vector.broadcast %cst_23 : f32 to vector<16x1024xf32>
    %62 = arith.cmpf ogt, %60, %61 : vector<16x1024xf32>
    %cst_24 = arith.constant 2.000000e-01 : f32
    %63 = vector.broadcast %cst_24 : f32 to vector<16x1024xf32>
    %64 = arith.mulf %63, %60 : vector<16x1024xf32>
    %65 = arith.select %62, %60, %64 : vector<16x1024xi1>, vector<16x1024xf32>
    %66 = arith.addf %65, %39 : vector<16x1024xf32>
    %cst_25 = arith.constant 0.000000e+00 : f32
    %67 = vector.broadcast %cst_25 : f32 to vector<16x1024xf32>
    %68 = arith.maximumf %66, %67 : vector<16x1024xf32>
    %c0_26 = arith.constant 0 : index
    %c0_27 = arith.constant 0 : index
    %69 = vector.load %arg6[%c0_26, %c0_27] : memref<16x1024xf32, #tpu.memory_space<vmem>>, vector<16x1024xf32>
    tpu.vector_store %arg6[%c0_26, %c0_27], %68 {strides = array<i32>} : memref<16x1024xf32, #tpu.memory_space<vmem>>, vector<16x1024xf32>,
    return
  }
  func.func @transform_0(%arg0: i32) -> (i32, i32) {
    %c0_i32 = arith.constant 0 : i32
    %c0_i32_0 = arith.constant 0 : i32
    return %c0_i32, %arg0 : i32, i32
  }
  func.func @transform_1(%arg0: i32) -> (i32, i32) {
    %c0_i32 = arith.constant 0 : i32
    %c0_i32_0 = arith.constant 0 : i32
    %c0_i32_1 = arith.constant 0 : i32
    return %c0_i32, %c0_i32_0 : i32, i32
  }
  func.func @transform_2(%arg0: i32) -> (i32, i32) {
    %c0_i32 = arith.constant 0 : i32
    %c0_i32_0 = arith.constant 0 : i32
    %c0_i32_1 = arith.constant 0 : i32
    return %c0_i32, %c0_i32_0 : i32, i32
  }
  func.func @transform_3(%arg0: i32) -> (i32, i32) {
    %c0_i32 = arith.constant 0 : i32
    %c0_i32_0 = arith.constant 0 : i32
    %c0_i32_1 = arith.constant 0 : i32
    return %c0_i32, %c0_i32_0 : i32, i32
  }
  func.func @transform_4(%arg0: i32) -> (i32, i32) {
    %c0_i32 = arith.constant 0 : i32
    %c0_i32_0 = arith.constant 0 : i32
    %c0_i32_1 = arith.constant 0 : i32
    return %c0_i32, %c0_i32_0 : i32, i32
  }
  func.func @transform_5(%arg0: i32) -> (i32, i32) {
    %c0_i32 = arith.constant 0 : i32
    %c0_i32_0 = arith.constant 0 : i32
    return %c0_i32, %arg0 : i32, i32
  }
}

</mosaic_0001>

<llo_original>
// kernel: tpu_custom_call.1
$region0: #{tpu_custom_call.1}
  #allocation0 [shape = 'u32[]', space=smem, size = 0x4, offset = 0x4, fixed_abs, tag = 'smem constant byte address 0x4 - core index']
  #allocation1 [shape = 'u32[144,128]{1,0:T(1,128)}', space=vmem, size = 0x12000, scoped, tag = 'internal scratch']
  %s0 = inlined_call_operand.vmem [shape: f32[8,1024], index: 0, kind: input, shape index: {}]
  %s1 = inlined_call_operand.vmem [shape: f32[32,24], index: 1, kind: input, shape index: {}]
  %s2 = inlined_call_operand.vmem [shape: f32[32,1], index: 2, kind: input, shape index: {}]
  %s3 = inlined_call_operand.vmem [shape: f32[16,48], index: 3, kind: input, shape index: {}]
  %s4 = inlined_call_operand.vmem [shape: f32[16,1], index: 4, kind: input, shape index: {}]
  %s5 = inlined_call_operand.hbm [shape: f32[16,1024], index: 5, kind: output, shape index: {}]
  %s6 = sld [smem:[#allocation0]]
  $region30: #{tpu_custom_call.1} parent=0
    _
  %s8 = ssub.s32 1, %s6
  %s9 = scalar_select 0, %s8, %s6
  $region1: #{tpu_custom_call.1} parent=0
    #allocation2 [shape = 'u8[65536]{0}', space=vmem, size = 0x10000, scoped, tag = 'output window, operand 0, single buffered']
    #allocation3 [shape = 's32[1]{0}', space=sflag, size = 0x4, scoped, tag = 'scoped memory for tpu_custom_call.1']
    %10 = vsyncpa [#allocation3], 0
    // Predicated region
    $region2: #{tpu_custom_call.1} parent=1 // pred_check
      _
    $region3: #{tpu_custom_call.1} parent=1 // pred_check_branch
      %12 = sbr.rel (0) target = $region5
    $region4: #{tpu_custom_call.1} parent=1 // pred_region
      _
    $region5: #{tpu_custom_call.1} parent=1 // pred_fallthru
      _
    // Predicated region
    $region6: #{tpu_custom_call.1} parent=1 // pred_check
      _
    $region7: #{tpu_custom_call.1} parent=1 // pred_check_branch
      %14 = sbr.rel (0) target = $region9
    $region8: #{tpu_custom_call.1} parent=1 // pred_region
      _
    $region9: #{tpu_custom_call.1} parent=1 // pred_fallthru
      _
    // Predicated region
    $region10: #{tpu_custom_call.1} parent=1 // pred_check
      _
    $region11: #{tpu_custom_call.1} parent=1 // pred_check_branch
      %16 = sbr.rel (0) target = $region13
    $region12: #{tpu_custom_call.1} parent=1 // pred_region
      _
    $region13: #{tpu_custom_call.1} parent=1 // pred_fallthru
      _
    // Predicated region
    $region14: #{tpu_custom_call.1} parent=1 // pred_check
      _
    $region15: #{tpu_custom_call.1} parent=1 // pred_check_branch
      %18 = sbr.rel (0) target = $region17
    $region16: #{tpu_custom_call.1} parent=1 // pred_region
      _
    $region17: #{tpu_custom_call.1} parent=1 // pred_fallthru
      _
    // Predicated region
    $region18: #{tpu_custom_call.1} parent=1 // pred_check
      _
    $region19: #{tpu_custom_call.1} parent=1 // pred_check_branch
      %20 = sbr.rel (0) target = $region21
    $region20: #{tpu_custom_call.1} parent=1 // pred_region
      _
    $region21: #{tpu_custom_call.1} parent=1 // pred_fallthru
      _
    %v21 = vld [vmem:[%s0] sm:$0xff]
    %v22 = vld [vmem:[%s0 + $0x8] sm:$0xff]
    %v23 = vld [vmem:[%s0 + $0x10] sm:$0xff]
    %v24 = vld [vmem:[%s0 + $0x18] sm:$0xff]
    %v25 = vld [vmem:[%s0 + $0x20] sm:$0xff]
    %v26 = vld [vmem:[%s0 + $0x28] sm:$0xff]
    %v27 = vld [vmem:[%s0 + $0x30] sm:$0xff]
    %v28 = vld [vmem:[%s0 + $0x38] sm:$0xff]
    %v29 = vlaneseq
    %v30 = vand.u32 %v29, 127
    %v31 = vadd.s32 %v30, 128
    %v32 = vadd.s32 %v30, 256
    %v33 = vadd.s32 %v30, 384
    %v34 = vadd.s32 %v30, 512
    %v35 = vadd.s32 %v30, 640
    %v36 = vadd.s32 %v30, 768
    %v37 = vadd.s32 %v30, 896
    %vm38 = vcmp.lt.s32.totalorder %v30, 0
    %v39 = vsub.s32 0, %v30
    %v40 = vsel %vm38, %v39, %v30
    %v41 = vshrl.u32 %v40, 7
    %v42 = vand.u32 %v40, 127
    %v43 = vsub.s32 0, %v42
    %v44 = vsel %vm38, %v43, %v42
    %vm45 = vcmp.lt.s32.totalorder %v31, 0
    %v46 = vsub.s32 0, %v31
    %v47 = vsel %vm45, %v46, %v31
    %v48 = vshrl.u32 %v47, 7
    %v49 = vand.u32 %v47, 127
    %v50 = vsub.s32 0, %v49
    %v51 = vsel %vm45, %v50, %v49
    %vm52 = vcmp.lt.s32.totalorder %v32, 0
    %v53 = vsub.s32 0, %v32
    %v54 = vsel %vm52, %v53, %v32
    %v55 = vshrl.u32 %v54, 7
    %v56 = vand.u32 %v54, 127
    %v57 = vsub.s32 0, %v56
    %v58 = vsel %vm52, %v57, %v56
    %vm59 = vcmp.lt.s32.totalorder %v33, 0
    %v60 = vsub.s32 0, %v33
    %v61 = vsel %vm59, %v60, %v33
    %v62 = vshrl.u32 %v61, 7
    %v63 = vand.u32 %v61, 127
    %v64 = vsub.s32 0, %v63
    %v65 = vsel %vm59, %v64, %v63
    %vm66 = vcmp.lt.s32.totalorder %v34, 0
    %v67 = vsub.s32 0, %v34
    %v68 = vsel %vm66, %v67, %v34
    %v69 = vshrl.u32 %v68, 7
    %v70 = vand.u32 %v68, 127
    %v71 = vsub.s32 0, %v70
    %v72 = vsel %vm66, %v71, %v70
    %vm73 = vcmp.lt.s32.totalorder %v35, 0
    %v74 = vsub.s32 0, %v35
    %v75 = vsel %vm73, %v74, %v35
    %v76 = vshrl.u32 %v75, 7
    %v77 = vand.u32 %v75, 127
    %v78 = vsub.s32 0, %v77
    %v79 = vsel %vm73, %v78, %v77
    %vm80 = vcmp.lt.s32.totalorder %v36, 0
    %v81 = vsub.s32 0, %v36
    %v82 = vsel %vm80, %v81, %v36
    %v83 = vshrl.u32 %v82, 7
    %v84 = vand.u32 %v82, 127
    %v85 = vsub.s32 0, %v84
    %v86 = vsel %vm80, %v85, %v84
    %vm87 = vcmp.lt.s32.totalorder %v37, 0
    %v88 = vsub.s32 0, %v37
    %v89 = vsel %vm87, %v88, %v37
    %v90 = vshrl.u32 %v89, 7
    %v91 = vand.u32 %v89, 127
    %v92 = vsub.s32 0, %v91
    %v93 = vsel %vm87, %v92, %v91
    %vm94 = vcmp.ne.s32.totalorder %v44, 0
    %vm95 = vcmp.ne.s32.totalorder %v51, 0
    %vm96 = vcmp.ne.s32.totalorder %v58, 0
    %vm97 = vcmp.ne.s32.totalorder %v65, 0
    %vm98 = vcmp.ne.s32.totalorder %v72, 0
    %vm99 = vcmp.ne.s32.totalorder %v79, 0
    %vm100 = vcmp.ne.s32.totalorder %v86, 0
    %vm101 = vcmp.ne.s32.totalorder %v93, 0
    %vm102 = vcmp.lt.s32.totalorder %v44, 0
    %vm103 = vcmp.lt.s32.totalorder %v51, 0
    %vm104 = vcmp.lt.s32.totalorder %v58, 0
    %vm105 = vcmp.lt.s32.totalorder %v65, 0
    %vm106 = vcmp.lt.s32.totalorder %v72, 0
    %vm107 = vcmp.lt.s32.totalorder %v79, 0
    %vm108 = vcmp.lt.s32.totalorder %v86, 0
    %vm109 = vcmp.lt.s32.totalorder %v93, 0
    %vm110 = vmand %vm102, %vm94
    %vm111 = vmand %vm103, %vm95
    %vm112 = vmand %vm104, %vm96
    %vm113 = vmand %vm105, %vm97
    %vm114 = vmand %vm106, %vm98
    %vm115 = vmand %vm107, %vm99
    %vm116 = vmand %vm108, %vm100
    %vm117 = vmand %vm109, %vm101
    %v118 = vadd.s32 %v44, 128
    %v119 = vadd.s32 %v51, 128
    %v120 = vadd.s32 %v58, 128
    %v121 = vadd.s32 %v65, 128
    %v122 = vadd.s32 %v72, 128
    %v123 = vadd.s32 %v79, 128
    %v124 = vadd.s32 %v86, 128
    %v125 = vadd.s32 %v93, 128
    %v126 = vsel %vm110, %v118, %v44
    %v127 = vsel %vm111, %v119, %v51
    %v128 = vsel %vm112, %v120, %v58
    %v129 = vsel %vm113, %v121, %v65
    %v130 = vsel %vm114, %v122, %v72
    %v131 = vsel %vm115, %v123, %v79
    %v132 = vsel %vm116, %v124, %v86
    %v133 = vsel %vm117, %v125, %v93
    %vm134 = vcmp.ge.s32.totalorder %v126, 4
    %vm135 = vcmp.ge.s32.totalorder %v127, 4
    %vm136 = vcmp.ge.s32.totalorder %v128, 4
    %vm137 = vcmp.ge.s32.totalorder %v129, 4
    %vm138 = vcmp.ge.s32.totalorder %v130, 4
    %vm139 = vcmp.ge.s32.totalorder %v131, 4
    %vm140 = vcmp.ge.s32.totalorder %v132, 4
    %vm141 = vcmp.ge.s32.totalorder %v133, 4
    %vm142 = vcmp.ge.s32.totalorder %v126, 2
    %vm143 = vcmp.ge.s32.totalorder %v127, 2
    %vm144 = vcmp.ge.s32.totalorder %v128, 2
    %vm145 = vcmp.ge.s32.totalorder %v129, 2
    %vm146 = vcmp.ge.s32.totalorder %v130, 2
    %vm147 = vcmp.ge.s32.totalorder %v131, 2
    %vm148 = vcmp.ge.s32.totalorder %v132, 2
    %vm149 = vcmp.ge.s32.totalorder %v133, 2
    %150 = vrot.lane.b32.xlu0 %v21, 4
    %v151 = vpop.permute.xlu0 %150
    %152 = vrot.lane.b32.xlu0 %v22, 4
    %v153 = vpop.permute.xlu0 %152
    %154 = vrot.lane.b32.xlu0 %v23, 4
    %v155 = vpop.permute.xlu0 %154
    %156 = vrot.lane.b32.xlu0 %v24, 4
    %v157 = vpop.permute.xlu0 %156
    %158 = vrot.lane.b32.xlu0 %v25, 4
    %v159 = vpop.permute.xlu0 %158
    %160 = vrot.lane.b32.xlu0 %v26, 4
    %v161 = vpop.permute.xlu0 %160
    %162 = vrot.lane.b32.xlu0 %v27, 4
    %v163 = vpop.permute.xlu0 %162
    %164 = vrot.lane.b32.xlu0 %v28, 4
    %v165 = vpop.permute.xlu0 %164
    %vm166 = vcmp.lt.s32.totalorder %v30, 4
    %v167 = vsel %vm166, %v163, %v165
    %v168 = vsel %vm166, %v161, %v163
    %v169 = vsel %vm166, %v159, %v161
    %v170 = vsel %vm166, %v157, %v159
    %v171 = vsel %vm166, %v155, %v157
    %v172 = vsel %vm166, %v153, %v155
    %v173 = vsel %vm166, %v151, %v153
    %v174 = vsel %vm166, %v165, %v151
    %v175 = vsel %vm134, 1, 0
    %v176 = vsel %vm135, 1, 0
    %v177 = vsel %vm136, 1, 0
    %v178 = vsel %vm137, 1, 0
    %v179 = vsel %vm138, 1, 0
    %v180 = vsel %vm139, 1, 0
    %v181 = vsel %vm140, 1, 0
    %v182 = vsel %vm141, 1, 0
    %vm183 = vcmp.eq.s32.totalorder %v175, 1
    %vm184 = vcmp.eq.s32.totalorder %v176, 1
    %vm185 = vcmp.eq.s32.totalorder %v177, 1
    %vm186 = vcmp.eq.s32.totalorder %v178, 1
    %vm187 = vcmp.eq.s32.totalorder %v179, 1
    %vm188 = vcmp.eq.s32.totalorder %v180, 1
    %vm189 = vcmp.eq.s32.totalorder %v181, 1
    %vm190 = vcmp.eq.s32.totalorder %v182, 1
    %v191 = vsel %vm183, %v174, 0.0
    %v192 = vsel %vm184, %v173, 0.0
    %v193 = vsel %vm185, %v172, 0.0
    %v194 = vsel %vm186, %v171, 0.0
    %v195 = vsel %vm187, %v170, 0.0
    %v196 = vsel %vm188, %v169, 0.0
    %v197 = vsel %vm189, %v168, 0.0
    %v198 = vsel %vm190, %v167, 0.0
    %199 = vrot.lane.b32.xlu0 %v21, 2
    %v200 = vpop.permute.xlu0 %199
    %201 = vrot.lane.b32.xlu0 %v22, 2
    %v202 = vpop.permute.xlu0 %201
    %203 = vrot.lane.b32.xlu0 %v23, 2
    %v204 = vpop.permute.xlu0 %203
    %205 = vrot.lane.b32.xlu0 %v24, 2
    %v206 = vpop.permute.xlu0 %205
    %207 = vrot.lane.b32.xlu0 %v25, 2
    %v208 = vpop.permute.xlu0 %207
    %209 = vrot.lane.b32.xlu0 %v26, 2
    %v210 = vpop.permute.xlu0 %209
    %211 = vrot.lane.b32.xlu0 %v27, 2
    %v212 = vpop.permute.xlu0 %211
    %213 = vrot.lane.b32.xlu0 %v28, 2
    %v214 = vpop.permute.xlu0 %213
    %vm215 = vcmp.lt.s32.totalorder %v30, 2
    %v216 = vsel %vm215, %v212, %v214
    %v217 = vsel %vm215, %v210, %v212
    %v218 = vsel %vm215, %v208, %v210
    %v219 = vsel %vm215, %v206, %v208
    %v220 = vsel %vm215, %v204, %v206
    %v221 = vsel %vm215, %v202, %v204
    %v222 = vsel %vm215, %v200, %v202
    %v223 = vsel %vm215, %v214, %v200
    %v224 = vsel %vm142, 1, 0
    %v225 = vsel %vm143, 1, 0
    %v226 = vsel %vm144, 1, 0
    %v227 = vsel %vm145, 1, 0
    %v228 = vsel %vm146, 1, 0
    %v229 = vsel %vm147, 1, 0
    %v230 = vsel %vm148, 1, 0
    %v231 = vsel %vm149, 1, 0
    %vm232 = vcmp.eq.s32.totalorder %v224, 1
    %vm233 = vcmp.eq.s32.totalorder %v225, 1
    %vm234 = vcmp.eq.s32.totalorder %v226, 1
    %vm235 = vcmp.eq.s32.totalorder %v227, 1
    %vm236 = vcmp.eq.s32.totalorder %v228, 1
    %vm237 = vcmp.eq.s32.totalorder %v229, 1
    %vm238 = vcmp.eq.s32.totalorder %v230, 1
    %vm239 = vcmp.eq.s32.totalorder %v231, 1
    %v240 = vsel %vm232, %v223, 0.0
    %v241 = vsel %vm233, %v222, 0.0
    %v242 = vsel %vm234, %v221, 0.0
    %v243 = vsel %vm235, %v220, 0.0
    %v244 = vsel %vm236, %v219, 0.0
    %v245 = vsel %vm237, %v218, 0.0
    %v246 = vsel %vm238, %v217, 0.0
    %v247 = vsel %vm239, %v216, 0.0
    %v248 = vld [vmem:[%s1] sm:$0xff]
    %v249 = vld [vmem:[%s1 + $0x8] sm:$0xff]
    %v250 = vld [vmem:[%s1 + $0x10] sm:$0xff]
    %v251 = vld [vmem:[%s1 + $0x18] sm:$0xff]
    %v252 = vld [vmem:[%s2] sm:$0xff]
    %v253 = vld [vmem:[%s2 + $0x8] sm:$0xff]
    %v254 = vld [vmem:[%s2 + $0x10] sm:$0xff]
    %v255 = vld [vmem:[%s2 + $0x18] sm:$0xff]
    %257 = vset.pattern.permute.xlu0 0
    %258 = vperm.xlu0 %257, %v252
    %v259 = vpop.permute.xlu0 %258
    %262 = vset.pattern.permute.xlu0 0
    %263 = vperm.xlu0 %262, %v253
    %v264 = vpop.permute.xlu0 %263
    %267 = vset.pattern.permute.xlu0 0
    %268 = vperm.xlu0 %267, %v254
    %v269 = vpop.permute.xlu0 %268
    %272 = vset.pattern.permute.xlu0 0
    %273 = vperm.xlu0 %272, %v255
    %v274 = vpop.permute.xlu0 %273
    %vm276 = vcmask 195584
    %v278 = vsel %vm276, %v248, 0
    %v281 = vsel %vm276, %v249, 0
    %v284 = vsel %vm276, %v250, 0
    %v287 = vsel %vm276, %v251, 0
    %289 = vmatprep.subr.mxu0 %v192
    %290 = vmatpush1.msra.mxu0 %v191
    %291 = vmatprep.subr.mxu0 %v241
    %292 = vmatpush1.msra.mxu0 %v240
    %293 = vmatprep.subr.mxu0 %v22
    %294 = vmatpush1.msra.mxu0 %v21
    %295 = vmatprep.subr.mxu0 0.0
    %296 = vmatpush1.msra.mxu0 0.0
    %297 = vmatprep.subr.mxu0 0.0
    %298 = vmatpush1.msra.mxu0 0.0
    %299 = vmatprep.subr.mxu0 0.0
    %300 = vmatpush1.msra.mxu0 0.0
    %301 = vmatprep.subr.mxu0 0.0
    %302 = vmatpush1.msra.mxu0 0.0
    %303 = vmatprep.subr.mxu0 0.0
    %304 = vmatpush1.msra.mxu0 0.0
    %305 = vmatprep.subr.mxu0 0.0
    %306 = vmatpush1.msra.mxu0 0.0
    %307 = vmatprep.subr.mxu0 0.0
    %308 = vmatpush1.msra.mxu0 0.0
    %309 = vmatprep.subr.mxu0 0.0
    %310 = vmatpush1.msra.mxu0 0.0
    %311 = vmatprep.subr.mxu0 0.0
    %312 = vmatpush1.msra.mxu0 0.0
    %313 = vmatprep.subr.mxu0 0.0
    %314 = vmatpush1.msra.mxu0 0.0
    %315 = vmatprep.subr.mxu0 0.0
    %316 = vmatpush1.msra.mxu0 0.0
    %317 = vmatprep.subr.mxu0 0.0
    %318 = vmatpush1.msra.mxu0 0.0
    %319 = vmatprep.subr.mxu0 0.0
    %320 = vmatpush1.msra.mxu0 0.0
    %321 = vmatprep.subr.mxu0 0.0
    %322 = vmatpush1.msra.mxu0 0.0
    %323 = vmatprep.subr.mxu0 0.0
    %324 = vmatpush1.msra.mxu0 0.0
    %325 = vmatprep.subr.mxu0 0.0
    %326 = vmatpush1.msra.mxu0 0.0
    %327 = vmatprep.subr.mxu0 0.0
    %328 = vmatpush1.msra.mxu0 0.0
    %329 = vmatprep.subr.mxu0 0.0
    %330 = vmatpush1.msra.mxu0 0.0
    %331 = vmatprep.subr.mxu0 0.0
    %332 = vmatpush1.msra.mxu0 0.0
    %333 = vmatprep.subr.mxu0 0.0
    %334 = vmatpush1.msra.mxu0 0.0
    %335 = vmatprep.subr.mxu0 0.0
    %336 = vmatpush1.msra.mxu0 0.0
    %337 = vmatprep.subr.mxu0 0.0
    %338 = vmatpush1.msra.mxu0 0.0
    %339 = vmatprep.subr.mxu0 0.0
    %340 = vmatpush1.msra.mxu0 0.0
    %341 = vmatprep.subr.mxu0 0.0
    %342 = vmatpush1.msra.mxu0 0.0
    %343 = vmatprep.subr.mxu0 0.0
    %344 = vmatpush1.msra.mxu0 0.0
    %345 = vmatprep.subr.mxu0 0.0
    %346 = vmatpush1.msra.mxu0 0.0
    %347 = vmatprep.subr.mxu0 0.0
    %348 = vmatpush1.msra.mxu0 0.0
    %349 = vmatprep.subr.mxu0 0.0
    %350 = vmatpush1.msra.mxu0 0.0
    %351 = vmatprep.subr.mxu0 0.0
    %352 = vmatpush1.msra.mxu0 0.0
    %353 = vmatprep.mubr.f32.mxu0 0.0
    %354 = vmatmul.mubr.f32.gmra.mrb[0].mxu0 %v278
    %v355 = vpop.f32.mrb[0].mxu0
    %v356 = vadd.f32 %v259, %v355
    %v357 = vpop.f32.mrb[0].mxu0
    %v358 = vadd.f32 %v259, %v357
    %359 = vmatprep.mubr.f32.mxu0 0.0
    %360 = vmatmul.mubr.f32.gmra.mrb[0].mxu0 %v281
    %v361 = vpop.f32.mrb[0].mxu0
    %v362 = vadd.f32 %v264, %v361
    %v363 = vpop.f32.mrb[0].mxu0
    %v364 = vadd.f32 %v264, %v363
    %365 = vmatprep.mubr.f32.mxu0 0.0
    %366 = vmatmul.mubr.f32.gmra.mrb[0].mxu0 %v284
    %v367 = vpop.f32.mrb[0].mxu0
    %v368 = vadd.f32 %v269, %v367
    %v369 = vpop.f32.mrb[0].mxu0
    %v370 = vadd.f32 %v269, %v369
    %371 = vmatprep.mubr.f32.mxu0 0.0
    %372 = vmatmul.mubr.f32.gmra.mrb[0].mxu0 %v287
    %v373 = vpop.f32.mrb[0].mxu0
    %v374 = vadd.f32 %v274, %v373
    %v375 = vpop.f32.mrb[0].mxu0
    %v376 = vadd.f32 %v274, %v375
    %377 = vdwg.mxu0
    %378 = vmatprep.subr.mxu0 %v194
    %379 = vmatpush1.msra.mxu0 %v193
    %380 = vmatprep.subr.mxu0 %v243
    %381 = vmatpush1.msra.mxu0 %v242
    %382 = vmatprep.subr.mxu0 %v24
    %383 = vmatpush1.msra.mxu0 %v23
    %384 = vmatprep.subr.mxu0 0.0
    %385 = vmatpush1.msra.mxu0 0.0
    %386 = vmatprep.subr.mxu0 0.0
    %387 = vmatpush1.msra.mxu0 0.0
    %388 = vmatprep.subr.mxu0 0.0
    %389 = vmatpush1.msra.mxu0 0.0
    %390 = vmatprep.subr.mxu0 0.0
    %391 = vmatpush1.msra.mxu0 0.0
    %392 = vmatprep.subr.mxu0 0.0
    %393 = vmatpush1.msra.mxu0 0.0
    %394 = vmatprep.subr.mxu0 0.0
    %395 = vmatpush1.msra.mxu0 0.0
    %396 = vmatprep.subr.mxu0 0.0
    %397 = vmatpush1.msra.mxu0 0.0
    %398 = vmatprep.subr.mxu0 0.0
    %399 = vmatpush1.msra.mxu0 0.0
    %400 = vmatprep.subr.mxu0 0.0
    %401 = vmatpush1.msra.mxu0 0.0
    %402 = vmatprep.subr.mxu0 0.0
    %403 = vmatpush1.msra.mxu0 0.0
    %404 = vmatprep.subr.mxu0 0.0
    %405 = vmatpush1.msra.mxu0 0.0
    %406 = vmatprep.subr.mxu0 0.0
    %407 = vmatpush1.msra.mxu0 0.0
    %408 = vmatprep.subr.mxu0 0.0
    %409 = vmatpush1.msra.mxu0 0.0
    %410 = vmatprep.subr.mxu0 0.0
    %411 = vmatpush1.msra.mxu0 0.0
    %412 = vmatprep.subr.mxu0 0.0
    %413 = vmatpush1.msra.mxu0 0.0
    %414 = vmatprep.subr.mxu0 0.0
    %415 = vmatpush1.msra.mxu0 0.0
    %416 = vmatprep.subr.mxu0 0.0
    %417 = vmatpush1.msra.mxu0 0.0
    %418 = vmatprep.subr.mxu0 0.0
    %419 = vmatpush1.msra.mxu0 0.0
    %420 = vmatprep.subr.mxu0 0.0
    %421 = vmatpush1.msra.mxu0 0.0
    %422 = vmatprep.subr.mxu0 0.0
    %423 = vmatpush1.msra.mxu0 0.0
    %424 = vmatprep.subr.mxu0 0.0
    %425 = vmatpush1.msra.mxu0 0.0
    %426 = vmatprep.subr.mxu0 0.0
    %427 = vmatpush1.msra.mxu0 0.0
    %428 = vmatprep.subr.mxu0 0.0
    %429 = vmatpush1.msra.mxu0 0.0
    %430 = vmatprep.subr.mxu0 0.0
    %431 = vmatpush1.msra.mxu0 0.0
    %432 = vmatprep.subr.mxu0 0.0
    %433 = vmatpush1.msra.mxu0 0.0
    %434 = vmatprep.subr.mxu0 0.0
    %435 = vmatpush1.msra.mxu0 0.0
    %436 = vmatprep.subr.mxu0 0.0
    %437 = vmatpush1.msra.mxu0 0.0
    %438 = vmatprep.subr.mxu0 0.0
    %439 = vmatpush1.msra.mxu0 0.0
    %440 = vmatprep.subr.mxu0 0.0
    %441 = vmatpush1.msra.mxu0 0.0
    %442 = vmatprep.mubr.f32.mxu0 0.0
    %443 = vmatmul.mubr.f32.gmra.mrb[0].mxu0 %v278
    %v444 = vpop.f32.mrb[0].mxu0
    %v445 = vadd.f32 %v259, %v444
    %v446 = vpop.f32.mrb[0].mxu0
    %v447 = vadd.f32 %v259, %v446
    %448 = vmatprep.mubr.f32.mxu0 0.0
    %449 = vmatmul.mubr.f32.gmra.mrb[0].mxu0 %v281
    %v450 = vpop.f32.mrb[0].mxu0
    %v451 = vadd.f32 %v264, %v450
    %v452 = vpop.f32.mrb[0].mxu0
    %v453 = vadd.f32 %v264, %v452
    %454 = vmatprep.mubr.f32.mxu0 0.0
    %455 = vmatmul.mubr.f32.gmra.mrb[0].mxu0 %v284
    %v456 = vpop.f32.mrb[0].mxu0
    %v457 = vadd.f32 %v269, %v456
    %v458 = vpop.f32.mrb[0].mxu0
    %v459 = vadd.f32 %v269, %v458
    %460 = vmatprep.mubr.f32.mxu0 0.0
    %461 = vmatmul.mubr.f32.gmra.mrb[0].mxu0 %v287
    %v462 = vpop.f32.mrb[0].mxu0
    %v463 = vadd.f32 %v274, %v462
    %v464 = vpop.f32.mrb[0].mxu0
    %v465 = vadd.f32 %v274, %v464
    %466 = vdwg.mxu0
    %467 = vmatprep.subr.mxu0 %v196
    %468 = vmatpush1.msra.mxu0 %v195
    %469 = vmatprep.subr.mxu0 %v245
    %470 = vmatpush1.msra.mxu0 %v244
    %471 = vmatprep.subr.mxu0 %v26
    %472 = vmatpush1.msra.mxu0 %v25
    %473 = vmatprep.subr.mxu0 0.0
    %474 = vmatpush1.msra.mxu0 0.0
    %475 = vmatprep.subr.mxu0 0.0
    %476 = vmatpush1.msra.mxu0 0.0
    %477 = vmatprep.subr.mxu0 0.0
    %478 = vmatpush1.msra.mxu0 0.0
    %479 = vmatprep.subr.mxu0 0.0
    %480 = vmatpush1.msra.mxu0 0.0
    %481 = vmatprep.subr.mxu0 0.0
    %482 = vmatpush1.msra.mxu0 0.0
    %483 = vmatprep.subr.mxu0 0.0
    %484 = vmatpush1.msra.mxu0 0.0
    %485 = vmatprep.subr.mxu0 0.0
    %486 = vmatpush1.msra.mxu0 0.0
    %487 = vmatprep.subr.mxu0 0.0
    %488 = vmatpush1.msra.mxu0 0.0
    %489 = vmatprep.subr.mxu0 0.0
    %490 = vmatpush1.msra.mxu0 0.0
    %491 = vmatprep.subr.mxu0 0.0
    %492 = vmatpush1.msra.mxu0 0.0
    %493 = vmatprep.subr.mxu0 0.0
    %494 = vmatpush1.msra.mxu0 0.0
    %495 = vmatprep.subr.mxu0 0.0
    %496 = vmatpush1.msra.mxu0 0.0
    %497 = vmatprep.subr.mxu0 0.0
    %498 = vmatpush1.msra.mxu0 0.0
    %499 = vmatprep.subr.mxu0 0.0
    %500 = vmatpush1.msra.mxu0 0.0
    %501 = vmatprep.subr.mxu0 0.0
    %502 = vmatpush1.msra.mxu0 0.0
    %503 = vmatprep.subr.mxu0 0.0
    %504 = vmatpush1.msra.mxu0 0.0
    %505 = vmatprep.subr.mxu0 0.0
    %506 = vmatpush1.msra.mxu0 0.0
    %507 = vmatprep.subr.mxu0 0.0
    %508 = vmatpush1.msra.mxu0 0.0
    %509 = vmatprep.subr.mxu0 0.0
    %510 = vmatpush1.msra.mxu0 0.0
    %511 = vmatprep.subr.mxu0 0.0
    %512 = vmatpush1.msra.mxu0 0.0
    %513 = vmatprep.subr.mxu0 0.0
    %514 = vmatpush1.msra.mxu0 0.0
    %515 = vmatprep.subr.mxu0 0.0
    %516 = vmatpush1.msra.mxu0 0.0
    %517 = vmatprep.subr.mxu0 0.0
    %518 = vmatpush1.msra.mxu0 0.0
    %519 = vmatprep.subr.mxu0 0.0
    %520 = vmatpush1.msra.mxu0 0.0
    %521 = vmatprep.subr.mxu0 0.0
    %522 = vmatpush1.msra.mxu0 0.0
    %523 = vmatprep.subr.mxu0 0.0
    %524 = vmatpush1.msra.mxu0 0.0
    %525 = vmatprep.subr.mxu0 0.0
    %526 = vmatpush1.msra.mxu0 0.0
    %527 = vmatprep.subr.mxu0 0.0
    %528 = vmatpush1.msra.mxu0 0.0
    %529 = vmatprep.subr.mxu0 0.0
    %530 = vmatpush1.msra.mxu0 0.0
    %531 = vmatprep.mubr.f32.mxu0 0.0
    %532 = vmatmul.mubr.f32.gmra.mrb[0].mxu0 %v278
    %v533 = vpop.f32.mrb[0].mxu0
    %v534 = vadd.f32 %v259, %v533
    %v535 = vpop.f32.mrb[0].mxu0
    %v536 = vadd.f32 %v259, %v535
    %537 = vmatprep.mubr.f32.mxu0 0.0
    %538 = vmatmul.mubr.f32.gmra.mrb[0].mxu0 %v281
    %v539 = vpop.f32.mrb[0].mxu0
    %v540 = vadd.f32 %v264, %v539
    %v541 = vpop.f32.mrb[0].mxu0
    %v542 = vadd.f32 %v264, %v541
    %543 = vmatprep.mubr.f32.mxu0 0.0
    %544 = vmatmul.mubr.f32.gmra.mrb[0].mxu0 %v284
    %v545 = vpop.f32.mrb[0].mxu0
    %v546 = vadd.f32 %v269, %v545
    %v547 = vpop.f32.mrb[0].mxu0
    %v548 = vadd.f32 %v269, %v547
    %549 = vmatprep.mubr.f32.mxu0 0.0
    %550 = vmatmul.mubr.f32.gmra.mrb[0].mxu0 %v287
    %v551 = vpop.f32.mrb[0].mxu0
    %v552 = vadd.f32 %v274, %v551
    %v553 = vpop.f32.mrb[0].mxu0
    %v554 = vadd.f32 %v274, %v553
    %555 = vdwg.mxu0
    %556 = vmatprep.subr.mxu0 %v198
    %557 = vmatpush1.msra.mxu0 %v197
    %558 = vmatprep.subr.mxu0 %v247
    %559 = vmatpush1.msra.mxu0 %v246
    %560 = vmatprep.subr.mxu0 %v28
    %561 = vmatpush1.msra.mxu0 %v27
    %562 = vmatprep.subr.mxu0 0.0
    %563 = vmatpush1.msra.mxu0 0.0
    %564 = vmatprep.subr.mxu0 0.0
    %565 = vmatpush1.msra.mxu0 0.0
    %566 = vmatprep.subr.mxu0 0.0
    %567 = vmatpush1.msra.mxu0 0.0
    %568 = vmatprep.subr.mxu0 0.0
    %569 = vmatpush1.msra.mxu0 0.0
    %570 = vmatprep.subr.mxu0 0.0
    %571 = vmatpush1.msra.mxu0 0.0
    %572 = vmatprep.subr.mxu0 0.0
    %573 = vmatpush1.msra.mxu0 0.0
    %574 = vmatprep.subr.mxu0 0.0
    %575 = vmatpush1.msra.mxu0 0.0
    %576 = vmatprep.subr.mxu0 0.0
    %577 = vmatpush1.msra.mxu0 0.0
    %578 = vmatprep.subr.mxu0 0.0
    %579 = vmatpush1.msra.mxu0 0.0
    %580 = vmatprep.subr.mxu0 0.0
    %581 = vmatpush1.msra.mxu0 0.0
    %582 = vmatprep.subr.mxu0 0.0
    %583 = vmatpush1.msra.mxu0 0.0
    %584 = vmatprep.subr.mxu0 0.0
    %585 = vmatpush1.msra.mxu0 0.0
    %586 = vmatprep.subr.mxu0 0.0
    %587 = vmatpush1.msra.mxu0 0.0
    %588 = vmatprep.subr.mxu0 0.0
    %589 = vmatpush1.msra.mxu0 0.0
    %590 = vmatprep.subr.mxu0 0.0
    %591 = vmatpush1.msra.mxu0 0.0
    %592 = vmatprep.subr.mxu0 0.0
    %593 = vmatpush1.msra.mxu0 0.0
    %594 = vmatprep.subr.mxu0 0.0
    %595 = vmatpush1.msra.mxu0 0.0
    %596 = vmatprep.subr.mxu0 0.0
    %597 = vmatpush1.msra.mxu0 0.0
    %598 = vmatprep.subr.mxu0 0.0
    %599 = vmatpush1.msra.mxu0 0.0
    %600 = vmatprep.subr.mxu0 0.0
    %601 = vmatpush1.msra.mxu0 0.0
    %602 = vmatprep.subr.mxu0 0.0
    %603 = vmatpush1.msra.mxu0 0.0
    %604 = vmatprep.subr.mxu0 0.0
    %605 = vmatpush1.msra.mxu0 0.0
    %606 = vmatprep.subr.mxu0 0.0
    %607 = vmatpush1.msra.mxu0 0.0
    %608 = vmatprep.subr.mxu0 0.0
    %609 = vmatpush1.msra.mxu0 0.0
    %610 = vmatprep.subr.mxu0 0.0
    %611 = vmatpush1.msra.mxu0 0.0
    %612 = vmatprep.subr.mxu0 0.0
    %613 = vmatpush1.msra.mxu0 0.0
    %614 = vmatprep.subr.mxu0 0.0
    %615 = vmatpush1.msra.mxu0 0.0
    %616 = vmatprep.subr.mxu0 0.0
    %617 = vmatpush1.msra.mxu0 0.0
    %618 = vmatprep.subr.mxu0 0.0
    %619 = vmatpush1.msra.mxu0 0.0
    %620 = vmatprep.mubr.f32.mxu0 0.0
    %621 = vmatmul.mubr.f32.gmra.mrb[0].mxu0 %v278
    %v622 = vpop.f32.mrb[0].mxu0
    %v623 = vadd.f32 %v259, %v622
    %v624 = vpop.f32.mrb[0].mxu0
    %v625 = vadd.f32 %v259, %v624
    %626 = vmatprep.mubr.f32.mxu0 0.0
    %627 = vmatmul.mubr.f32.gmra.mrb[0].mxu0 %v281
    %v628 = vpop.f32.mrb[0].mxu0
    %v629 = vadd.f32 %v264, %v628
    %v630 = vpop.f32.mrb[0].mxu0
    %v631 = vadd.f32 %v264, %v630
    %632 = vmatprep.mubr.f32.mxu0 0.0
    %633 = vmatmul.mubr.f32.gmra.mrb[0].mxu0 %v284
    %v634 = vpop.f32.mrb[0].mxu0
    %v635 = vadd.f32 %v269, %v634
    %v636 = vpop.f32.mrb[0].mxu0
    %v637 = vadd.f32 %v269, %v636
    %638 = vmatprep.mubr.f32.mxu0 0.0
    %639 = vmatmul.mubr.f32.gmra.mrb[0].mxu0 %v287
    %v640 = vpop.f32.mrb[0].mxu0
    %v641 = vadd.f32 %v274, %v640
    %v642 = vpop.f32.mrb[0].mxu0
    %v643 = vadd.f32 %v274, %v642
    %644 = vdwg.mxu0
    %vm645 = vcmp.gt.f32.partialorder %v356, 0.0
    %vm646 = vcmp.gt.f32.partialorder %v358, 0.0
    %vm647 = vcmp.gt.f32.partialorder %v445, 0.0
    %vm648 = vcmp.gt.f32.partialorder %v447, 0.0
    %vm649 = vcmp.gt.f32.partialorder %v534, 0.0
    %vm650 = vcmp.gt.f32.partialorder %v536, 0.0
    %vm651 = vcmp.gt.f32.partialorder %v623, 0.0
    %vm652 = vcmp.gt.f32.partialorder %v625, 0.0
    %vm653 = vcmp.gt.f32.partialorder %v362, 0.0
    %vm654 = vcmp.gt.f32.partialorder %v364, 0.0
    %vm655 = vcmp.gt.f32.partialorder %v451, 0.0
    %vm656 = vcmp.gt.f32.partialorder %v453, 0.0
    %vm657 = vcmp.gt.f32.partialorder %v540, 0.0
    %vm658 = vcmp.gt.f32.partialorder %v542, 0.0
    %vm659 = vcmp.gt.f32.partialorder %v629, 0.0
    %vm660 = vcmp.gt.f32.partialorder %v631, 0.0
    %v661 = vmul.f32 %v356, 0.2
    %v662 = vmul.f32 %v358, 0.2
    %v663 = vmul.f32 %v445, 0.2
    %v664 = vmul.f32 %v447, 0.2
    %v665 = vmul.f32 %v534, 0.2
    %v666 = vmul.f32 %v536, 0.2
    %v667 = vmul.f32 %v623, 0.2
    %v668 = vmul.f32 %v625, 0.2
    %v669 = vmul.f32 %v362, 0.2
    %v670 = vmul.f32 %v364, 0.2
    %v671 = vmul.f32 %v451, 0.2
    %v672 = vmul.f32 %v453, 0.2
    %v673 = vmul.f32 %v540, 0.2
    %v674 = vmul.f32 %v542, 0.2
    %v675 = vmul.f32 %v629, 0.2
    %v676 = vmul.f32 %v631, 0.2
    %v677 = vsel %vm645, %v356, %v661
    %v678 = vsel %vm646, %v358, %v662
    %v679 = vsel %vm647, %v445, %v663
    %v680 = vsel %vm648, %v447, %v664
    %v681 = vsel %vm649, %v534, %v665
    %v682 = vsel %vm650, %v536, %v666
    %v683 = vsel %vm651, %v623, %v667
    %v684 = vsel %vm652, %v625, %v668
    %v685 = vsel %vm653, %v362, %v669
    %v686 = vsel %vm654, %v364, %v670
    %v687 = vsel %vm655, %v451, %v671
    %v688 = vsel %vm656, %v453, %v672
    %v689 = vsel %vm657, %v540, %v673
    %v690 = vsel %vm658, %v542, %v674
    %v691 = vsel %vm659, %v629, %v675
    %v692 = vsel %vm660, %v631, %v676
    %693 = vrot.lane.b32.xlu0 %v677, 4
    %v694 = vpop.permute.xlu0 %693
    %695 = vrot.lane.b32.xlu0 %v685, 4
    %v696 = vpop.permute.xlu0 %695
    %697 = vrot.lane.b32.xlu0 %v678, 4
    %v698 = vpop.permute.xlu0 %697
    %699 = vrot.lane.b32.xlu0 %v686, 4
    %v700 = vpop.permute.xlu0 %699
    %701 = vrot.lane.b32.xlu0 %v679, 4
    %v702 = vpop.permute.xlu0 %701
    %703 = vrot.lane.b32.xlu0 %v687, 4
    %v704 = vpop.permute.xlu0 %703
    %705 = vrot.lane.b32.xlu0 %v680, 4
    %v706 = vpop.permute.xlu0 %705
    %707 = vrot.lane.b32.xlu0 %v688, 4
    %v708 = vpop.permute.xlu0 %707
    %709 = vrot.lane.b32.xlu0 %v681, 4
    %v710 = vpop.permute.xlu0 %709
    %711 = vrot.lane.b32.xlu0 %v689, 4
    %v712 = vpop.permute.xlu0 %711
    %713 = vrot.lane.b32.xlu0 %v682, 4
    %v714 = vpop.permute.xlu0 %713
    %715 = vrot.lane.b32.xlu0 %v690, 4
    %v716 = vpop.permute.xlu0 %715
    %717 = vrot.lane.b32.xlu0 %v683, 4
    %v718 = vpop.permute.xlu0 %717
    %719 = vrot.lane.b32.xlu0 %v691, 4
    %v720 = vpop.permute.xlu0 %719
    %721 = vrot.lane.b32.xlu0 %v684, 4
    %v722 = vpop.permute.xlu0 %721
    %723 = vrot.lane.b32.xlu0 %v692, 4
    %v724 = vpop.permute.xlu0 %723
    %v725 = vsel %vm166, %v718, %v722
    %v726 = vsel %vm166, %v720, %v724
    %v727 = vsel %vm166, %v714, %v718
    %v728 = vsel %vm166, %v716, %v720
    %v729 = vsel %vm166, %v710, %v714
    %v730 = vsel %vm166, %v712, %v716
    %v731 = vsel %vm166, %v706, %v710
    %v732 = vsel %vm166, %v708, %v712
    %v733 = vsel %vm166, %v702, %v706
    %v734 = vsel %vm166, %v704, %v708
    %v735 = vsel %vm166, %v698, %v702
    %v736 = vsel %vm166, %v700, %v704
    %v737 = vsel %vm166, %v694, %v698
    %v738 = vsel %vm166, %v696, %v700
    %v739 = vsel %vm166, %v722, %v694
    %v740 = vsel %vm166, %v724, %v696
    %v741 = vsel %vm183, %v739, 0.0
    %v742 = vsel %vm184, %v737, 0.0
    %v743 = vsel %vm185, %v735, 0.0
    %v744 = vsel %vm186, %v733, 0.0
    %v745 = vsel %vm187, %v731, 0.0
    %v746 = vsel %vm188, %v729, 0.0
    %v747 = vsel %vm189, %v727, 0.0
    %v748 = vsel %vm190, %v725, 0.0
    %v749 = vsel %vm183, %v740, 0.0
    %v750 = vsel %vm184, %v738, 0.0
    %v751 = vsel %vm185, %v736, 0.0
    %v752 = vsel %vm186, %v734, 0.0
    %v753 = vsel %vm187, %v732, 0.0
    %v754 = vsel %vm188, %v730, 0.0
    %v755 = vsel %vm189, %v728, 0.0
    %v756 = vsel %vm190, %v726, 0.0
    %757 = vrot.lane.b32.xlu0 %v677, 2
    %v758 = vpop.permute.xlu0 %757
    %759 = vrot.lane.b32.xlu0 %v685, 2
    %v760 = vpop.permute.xlu0 %759
    %761 = vrot.lane.b32.xlu0 %v678, 2
    %v762 = vpop.permute.xlu0 %761
    %763 = vrot.lane.b32.xlu0 %v686, 2
    %v764 = vpop.permute.xlu0 %763
    %765 = vrot.lane.b32.xlu0 %v679, 2
    %v766 = vpop.permute.xlu0 %765
    %767 = vrot.lane.b32.xlu0 %v687, 2
    %v768 = vpop.permute.xlu0 %767
    %769 = vrot.lane.b32.xlu0 %v680, 2
    %v770 = vpop.permute.xlu0 %769
    %771 = vrot.lane.b32.xlu0 %v688, 2
    %v772 = vpop.permute.xlu0 %771
    %773 = vrot.lane.b32.xlu0 %v681, 2
    %v774 = vpop.permute.xlu0 %773
    %775 = vrot.lane.b32.xlu0 %v689, 2
    %v776 = vpop.permute.xlu0 %775
    %777 = vrot.lane.b32.xlu0 %v682, 2
    %v778 = vpop.permute.xlu0 %777
    %779 = vrot.lane.b32.xlu0 %v690, 2
    %v780 = vpop.permute.xlu0 %779
    %781 = vrot.lane.b32.xlu0 %v683, 2
    %v782 = vpop.permute.xlu0 %781
    %783 = vrot.lane.b32.xlu0 %v691, 2
    %v784 = vpop.permute.xlu0 %783
    %785 = vrot.lane.b32.xlu0 %v684, 2
    %v786 = vpop.permute.xlu0 %785
    %787 = vrot.lane.b32.xlu0 %v692, 2
    %v788 = vpop.permute.xlu0 %787
    %v789 = vsel %vm215, %v782, %v786
    %v790 = vsel %vm215, %v784, %v788
    %v791 = vsel %vm215, %v778, %v782
    %v792 = vsel %vm215, %v780, %v784
    %v793 = vsel %vm215, %v774, %v778
    %v794 = vsel %vm215, %v776, %v780
    %v795 = vsel %vm215, %v770, %v774
    %v796 = vsel %vm215, %v772, %v776
    %v797 = vsel %vm215, %v766, %v770
    %v798 = vsel %vm215, %v768, %v772
    %v799 = vsel %vm215, %v762, %v766
    %v800 = vsel %vm215, %v764, %v768
    %v801 = vsel %vm215, %v758, %v762
    %v802 = vsel %vm215, %v760, %v764
    %v803 = vsel %vm215, %v786, %v758
    %v804 = vsel %vm215, %v788, %v760
    %v805 = vsel %vm232, %v803, 0.0
    %v806 = vsel %vm233, %v801, 0.0
    %v807 = vsel %vm234, %v799, 0.0
    %v808 = vsel %vm235, %v797, 0.0
    %v809 = vsel %vm236, %v795, 0.0
    %v810 = vsel %vm237, %v793, 0.0
    %v811 = vsel %vm238, %v791, 0.0
    %v812 = vsel %vm239, %v789, 0.0
    %v813 = vsel %vm232, %v804, 0.0
    %v814 = vsel %vm233, %v802, 0.0
    %v815 = vsel %vm234, %v800, 0.0
    %v816 = vsel %vm235, %v798, 0.0
    %v817 = vsel %vm236, %v796, 0.0
    %v818 = vsel %vm237, %v794, 0.0
    %v819 = vsel %vm238, %v792, 0.0
    %v820 = vsel %vm239, %v790, 0.0
    %v821 = vld [vmem:[%s3] sm:$0xff]
    %v822 = vld [vmem:[%s3 + $0x8] sm:$0xff]
    %v823 = vld [vmem:[%s4] sm:$0xff]
    %v824 = vld [vmem:[%s4 + $0x8] sm:$0xff]
    %826 = vset.pattern.permute.xlu0 0
    %827 = vperm.xlu0 %826, %v823
    %v828 = vpop.permute.xlu0 %827
    %831 = vset.pattern.permute.xlu0 0
    %832 = vperm.xlu0 %831, %v824
    %v833 = vpop.permute.xlu0 %832
    %vm835 = vcmask 392192
    %v837 = vsel %vm835, %v821, 0
    %v840 = vsel %vm835, %v822, 0
    %842 = vmatprep.subr.mxu0 %v742
    %843 = vmatpush1.msra.mxu0 %v741
    %844 = vmatprep.subr.mxu0 %v750
    %845 = vmatpush1.msra.mxu0 %v749
    %846 = vmatprep.subr.mxu0 %v806
    %847 = vmatpush1.msra.mxu0 %v805
    %848 = vmatprep.subr.mxu0 %v814
    %849 = vmatpush1.msra.mxu0 %v813
    %850 = vmatprep.subr.mxu0 %v678
    %851 = vmatpush1.msra.mxu0 %v677
    %852 = vmatprep.subr.mxu0 %v686
    %853 = vmatpush1.msra.mxu0 %v685
    %854 = vmatprep.subr.mxu0 0.0
    %855 = vmatpush1.msra.mxu0 0.0
    %856 = vmatprep.subr.mxu0 0.0
    %857 = vmatpush1.msra.mxu0 0.0
    %858 = vmatprep.subr.mxu0 0.0
    %859 = vmatpush1.msra.mxu0 0.0
    %860 = vmatprep.subr.mxu0 0.0
    %861 = vmatpush1.msra.mxu0 0.0
    %862 = vmatprep.subr.mxu0 0.0
    %863 = vmatpush1.msra.mxu0 0.0
    %864 = vmatprep.subr.mxu0 0.0
    %865 = vmatpush1.msra.mxu0 0.0
    %866 = vmatprep.subr.mxu0 0.0
    %867 = vmatpush1.msra.mxu0 0.0
    %868 = vmatprep.subr.mxu0 0.0
    %869 = vmatpush1.msra.mxu0 0.0
    %870 = vmatprep.subr.mxu0 0.0
    %871 = vmatpush1.msra.mxu0 0.0
    %872 = vmatprep.subr.mxu0 0.0
    %873 = vmatpush1.msra.mxu0 0.0
    %874 = vmatprep.subr.mxu0 0.0
    %875 = vmatpush1.msra.mxu0 0.0
    %876 = vmatprep.subr.mxu0 0.0
    %877 = vmatpush1.msra.mxu0 0.0
    %878 = vmatprep.subr.mxu0 0.0
    %879 = vmatpush1.msra.mxu0 0.0
    %880 = vmatprep.subr.mxu0 0.0
    %881 = vmatpush1.msra.mxu0 0.0
    %882 = vmatprep.subr.mxu0 0.0
    %883 = vmatpush1.msra.mxu0 0.0
    %884 = vmatprep.subr.mxu0 0.0
    %885 = vmatpush1.msra.mxu0 0.0
    %886 = vmatprep.subr.mxu0 0.0
    %887 = vmatpush1.msra.mxu0 0.0
    %888 = vmatprep.subr.mxu0 0.0
    %889 = vmatpush1.msra.mxu0 0.0
    %890 = vmatprep.subr.mxu0 0.0
    %891 = vmatpush1.msra.mxu0 0.0
    %892 = vmatprep.subr.mxu0 0.0
    %893 = vmatpush1.msra.mxu0 0.0
    %894 = vmatprep.subr.mxu0 0.0
    %895 = vmatpush1.msra.mxu0 0.0
    %896 = vmatprep.subr.mxu0 0.0
    %897 = vmatpush1.msra.mxu0 0.0
    %898 = vmatprep.subr.mxu0 0.0
    %899 = vmatpush1.msra.mxu0 0.0
    %900 = vmatprep.subr.mxu0 0.0
    %901 = vmatpush1.msra.mxu0 0.0
    %902 = vmatprep.subr.mxu0 0.0
    %903 = vmatpush1.msra.mxu0 0.0
    %904 = vmatprep.subr.mxu0 0.0
    %905 = vmatpush1.msra.mxu0 0.0
    %906 = vmatprep.mubr.f32.mxu0 0.0
    %907 = vmatmul.mubr.f32.gmra.mrb[0].mxu0 %v837
    %v908 = vpop.f32.mrb[0].mxu0
    %v909 = vadd.f32 %v828, %v908
    %v910 = vpop.f32.mrb[0].mxu0
    %v911 = vadd.f32 %v828, %v910
    %912 = vmatprep.mubr.f32.mxu0 0.0
    %913 = vmatmul.mubr.f32.gmra.mrb[0].mxu0 %v840
    %v914 = vpop.f32.mrb[0].mxu0
    %v915 = vadd.f32 %v833, %v914
    %v916 = vpop.f32.mrb[0].mxu0
    %v917 = vadd.f32 %v833, %v916
    %918 = vdwg.mxu0
    %919 = vmatprep.subr.mxu0 %v744
    %920 = vmatpush1.msra.mxu0 %v743
    %921 = vmatprep.subr.mxu0 %v752
    %922 = vmatpush1.msra.mxu0 %v751
    %923 = vmatprep.subr.mxu0 %v808
    %924 = vmatpush1.msra.mxu0 %v807
    %925 = vmatprep.subr.mxu0 %v816
    %926 = vmatpush1.msra.mxu0 %v815
    %927 = vmatprep.subr.mxu0 %v680
    %928 = vmatpush1.msra.mxu0 %v679
    %929 = vmatprep.subr.mxu0 %v688
    %930 = vmatpush1.msra.mxu0 %v687
    %931 = vmatprep.subr.mxu0 0.0
    %932 = vmatpush1.msra.mxu0 0.0
    %933 = vmatprep.subr.mxu0 0.0
    %934 = vmatpush1.msra.mxu0 0.0
    %935 = vmatprep.subr.mxu0 0.0
    %936 = vmatpush1.msra.mxu0 0.0
    %937 = vmatprep.subr.mxu0 0.0
    %938 = vmatpush1.msra.mxu0 0.0
    %939 = vmatprep.subr.mxu0 0.0
    %940 = vmatpush1.msra.mxu0 0.0
    %941 = vmatprep.subr.mxu0 0.0
    %942 = vmatpush1.msra.mxu0 0.0
    %943 = vmatprep.subr.mxu0 0.0
    %944 = vmatpush1.msra.mxu0 0.0
    %945 = vmatprep.subr.mxu0 0.0
    %946 = vmatpush1.msra.mxu0 0.0
    %947 = vmatprep.subr.mxu0 0.0
    %948 = vmatpush1.msra.mxu0 0.0
    %949 = vmatprep.subr.mxu0 0.0
    %950 = vmatpush1.msra.mxu0 0.0
    %951 = vmatprep.subr.mxu0 0.0
    %952 = vmatpush1.msra.mxu0 0.0
    %953 = vmatprep.subr.mxu0 0.0
    %954 = vmatpush1.msra.mxu0 0.0
    %955 = vmatprep.subr.mxu0 0.0
    %956 = vmatpush1.msra.mxu0 0.0
    %957 = vmatprep.subr.mxu0 0.0
    %958 = vmatpush1.msra.mxu0 0.0
    %959 = vmatprep.subr.mxu0 0.0
    %960 = vmatpush1.msra.mxu0 0.0
    %961 = vmatprep.subr.mxu0 0.0
    %962 = vmatpush1.msra.mxu0 0.0
    %963 = vmatprep.subr.mxu0 0.0
    %964 = vmatpush1.msra.mxu0 0.0
    %965 = vmatprep.subr.mxu0 0.0
    %966 = vmatpush1.msra.mxu0 0.0
    %967 = vmatprep.subr.mxu0 0.0
    %968 = vmatpush1.msra.mxu0 0.0
    %969 = vmatprep.subr.mxu0 0.0
    %970 = vmatpush1.msra.mxu0 0.0
    %971 = vmatprep.subr.mxu0 0.0
    %972 = vmatpush1.msra.mxu0 0.0
    %973 = vmatprep.subr.mxu0 0.0
    %974 = vmatpush1.msra.mxu0 0.0
    %975 = vmatprep.subr.mxu0 0.0
    %976 = vmatpush1.msra.mxu0 0.0
    %977 = vmatprep.subr.mxu0 0.0
    %978 = vmatpush1.msra.mxu0 0.0
    %979 = vmatprep.subr.mxu0 0.0
    %980 = vmatpush1.msra.mxu0 0.0
    %981 = vmatprep.subr.mxu0 0.0
    %982 = vmatpush1.msra.mxu0 0.0
    %983 = vmatprep.mubr.f32.mxu0 0.0
    %984 = vmatmul.mubr.f32.gmra.mrb[0].mxu0 %v837
    %v985 = vpop.f32.mrb[0].mxu0
    %v986 = vadd.f32 %v828, %v985
    %v987 = vpop.f32.mrb[0].mxu0
    %v988 = vadd.f32 %v828, %v987
    %989 = vmatprep.mubr.f32.mxu0 0.0
    %990 = vmatmul.mubr.f32.gmra.mrb[0].mxu0 %v840
    %v991 = vpop.f32.mrb[0].mxu0
    %v992 = vadd.f32 %v833, %v991
    %v993 = vpop.f32.mrb[0].mxu0
    %v994 = vadd.f32 %v833, %v993
    %995 = vdwg.mxu0
    %996 = vmatprep.subr.mxu0 %v746
    %997 = vmatpush1.msra.mxu0 %v745
    %998 = vmatprep.subr.mxu0 %v754
    %999 = vmatpush1.msra.mxu0 %v753
    %1000 = vmatprep.subr.mxu0 %v810
    %1001 = vmatpush1.msra.mxu0 %v809
    %1002 = vmatprep.subr.mxu0 %v818
    %1003 = vmatpush1.msra.mxu0 %v817
    %1004 = vmatprep.subr.mxu0 %v682
    %1005 = vmatpush1.msra.mxu0 %v681
    %1006 = vmatprep.subr.mxu0 %v690
    %1007 = vmatpush1.msra.mxu0 %v689
    %1008 = vmatprep.subr.mxu0 0.0
    %1009 = vmatpush1.msra.mxu0 0.0
    %1010 = vmatprep.subr.mxu0 0.0
    %1011 = vmatpush1.msra.mxu0 0.0
    %1012 = vmatprep.subr.mxu0 0.0
    %1013 = vmatpush1.msra.mxu0 0.0
    %1014 = vmatprep.subr.mxu0 0.0
    %1015 = vmatpush1.msra.mxu0 0.0
    %1016 = vmatprep.subr.mxu0 0.0
    %1017 = vmatpush1.msra.mxu0 0.0
    %1018 = vmatprep.subr.mxu0 0.0
    %1019 = vmatpush1.msra.mxu0 0.0
    %1020 = vmatprep.subr.mxu0 0.0
    %1021 = vmatpush1.msra.mxu0 0.0
    %1022 = vmatprep.subr.mxu0 0.0
    %1023 = vmatpush1.msra.mxu0 0.0
    %1024 = vmatprep.subr.mxu0 0.0
    %1025 = vmatpush1.msra.mxu0 0.0
    %1026 = vmatprep.subr.mxu0 0.0
    %1027 = vmatpush1.msra.mxu0 0.0
    %1028 = vmatprep.subr.mxu0 0.0
    %1029 = vmatpush1.msra.mxu0 0.0
    %1030 = vmatprep.subr.mxu0 0.0
    %1031 = vmatpush1.msra.mxu0 0.0
    %1032 = vmatprep.subr.mxu0 0.0
    %1033 = vmatpush1.msra.mxu0 0.0
    %1034 = vmatprep.subr.mxu0 0.0
    %1035 = vmatpush1.msra.mxu0 0.0
    %1036 = vmatprep.subr.mxu0 0.0
    %1037 = vmatpush1.msra.mxu0 0.0
    %1038 = vmatprep.subr.mxu0 0.0
    %1039 = vmatpush1.msra.mxu0 0.0
    %1040 = vmatprep.subr.mxu0 0.0
    %1041 = vmatpush1.msra.mxu0 0.0
    %1042 = vmatprep.subr.mxu0 0.0
    %1043 = vmatpush1.msra.mxu0 0.0
    %1044 = vmatprep.subr.mxu0 0.0
    %1045 = vmatpush1.msra.mxu0 0.0
    %1046 = vmatprep.subr.mxu0 0.0
    %1047 = vmatpush1.msra.mxu0 0.0
    %1048 = vmatprep.subr.mxu0 0.0
    %1049 = vmatpush1.msra.mxu0 0.0
    %1050 = vmatprep.subr.mxu0 0.0
    %1051 = vmatpush1.msra.mxu0 0.0
    %1052 = vmatprep.subr.mxu0 0.0
    %1053 = vmatpush1.msra.mxu0 0.0
    %1054 = vmatprep.subr.mxu0 0.0
    %1055 = vmatpush1.msra.mxu0 0.0
    %1056 = vmatprep.subr.mxu0 0.0
    %1057 = vmatpush1.msra.mxu0 0.0
    %1058 = vmatprep.subr.mxu0 0.0
    %1059 = vmatpush1.msra.mxu0 0.0
    %1060 = vmatprep.mubr.f32.mxu0 0.0
    %1061 = vmatmul.mubr.f32.gmra.mrb[0].mxu0 %v837
    %v1062 = vpop.f32.mrb[0].mxu0
    %v1063 = vadd.f32 %v828, %v1062
    %v1064 = vpop.f32.mrb[0].mxu0
    %v1065 = vadd.f32 %v828, %v1064
    %1066 = vmatprep.mubr.f32.mxu0 0.0
    %1067 = vmatmul.mubr.f32.gmra.mrb[0].mxu0 %v840
    %v1068 = vpop.f32.mrb[0].mxu0
    %v1069 = vadd.f32 %v833, %v1068
    %v1070 = vpop.f32.mrb[0].mxu0
    %v1071 = vadd.f32 %v833, %v1070
    %1072 = vdwg.mxu0
    %1073 = vmatprep.subr.mxu0 %v748
    %1074 = vmatpush1.msra.mxu0 %v747
    %1075 = vmatprep.subr.mxu0 %v756
    %1076 = vmatpush1.msra.mxu0 %v755
    %1077 = vmatprep.subr.mxu0 %v812
    %1078 = vmatpush1.msra.mxu0 %v811
    %1079 = vmatprep.subr.mxu0 %v820
    %1080 = vmatpush1.msra.mxu0 %v819
    %1081 = vmatprep.subr.mxu0 %v684
    %1082 = vmatpush1.msra.mxu0 %v683
    %1083 = vmatprep.subr.mxu0 %v692
    %1084 = vmatpush1.msra.mxu0 %v691
    %1085 = vmatprep.subr.mxu0 0.0
    %1086 = vmatpush1.msra.mxu0 0.0
    %1087 = vmatprep.subr.mxu0 0.0
    %1088 = vmatpush1.msra.mxu0 0.0
    %1089 = vmatprep.subr.mxu0 0.0
    %1090 = vmatpush1.msra.mxu0 0.0
    %1091 = vmatprep.subr.mxu0 0.0
    %1092 = vmatpush1.msra.mxu0 0.0
    %1093 = vmatprep.subr.mxu0 0.0
    %1094 = vmatpush1.msra.mxu0 0.0
    %1095 = vmatprep.subr.mxu0 0.0
    %1096 = vmatpush1.msra.mxu0 0.0
    %1097 = vmatprep.subr.mxu0 0.0
    %1098 = vmatpush1.msra.mxu0 0.0
    %1099 = vmatprep.subr.mxu0 0.0
    %1100 = vmatpush1.msra.mxu0 0.0
    %1101 = vmatprep.subr.mxu0 0.0
    %1102 = vmatpush1.msra.mxu0 0.0
    %1103 = vmatprep.subr.mxu0 0.0
    %1104 = vmatpush1.msra.mxu0 0.0
    %1105 = vmatprep.subr.mxu0 0.0
    %1106 = vmatpush1.msra.mxu0 0.0
    %1107 = vmatprep.subr.mxu0 0.0
    %1108 = vmatpush1.msra.mxu0 0.0
    %1109 = vmatprep.subr.mxu0 0.0
    %1110 = vmatpush1.msra.mxu0 0.0
    %1111 = vmatprep.subr.mxu0 0.0
    %1112 = vmatpush1.msra.mxu0 0.0
    %1113 = vmatprep.subr.mxu0 0.0
    %1114 = vmatpush1.msra.mxu0 0.0
    %1115 = vmatprep.subr.mxu0 0.0
    %1116 = vmatpush1.msra.mxu0 0.0
    %1117 = vmatprep.subr.mxu0 0.0
    %1118 = vmatpush1.msra.mxu0 0.0
    %1119 = vmatprep.subr.mxu0 0.0
    %1120 = vmatpush1.msra.mxu0 0.0
    %1121 = vmatprep.subr.mxu0 0.0
    %1122 = vmatpush1.msra.mxu0 0.0
    %1123 = vmatprep.subr.mxu0 0.0
    %1124 = vmatpush1.msra.mxu0 0.0
    %1125 = vmatprep.subr.mxu0 0.0
    %1126 = vmatpush1.msra.mxu0 0.0
    %1127 = vmatprep.subr.mxu0 0.0
    %1128 = vmatpush1.msra.mxu0 0.0
    %1129 = vmatprep.subr.mxu0 0.0
    %1130 = vmatpush1.msra.mxu0 0.0
    %1131 = vmatprep.subr.mxu0 0.0
    %1132 = vmatpush1.msra.mxu0 0.0
    %1133 = vmatprep.subr.mxu0 0.0
    %1134 = vmatpush1.msra.mxu0 0.0
    %1135 = vmatprep.subr.mxu0 0.0
    %1136 = vmatpush1.msra.mxu0 0.0
    %1137 = vmatprep.mubr.f32.mxu0 0.0
    %1138 = vmatmul.mubr.f32.gmra.mrb[0].mxu0 %v837
    %v1139 = vpop.f32.mrb[0].mxu0
    %v1140 = vadd.f32 %v828, %v1139
    %v1141 = vpop.f32.mrb[0].mxu0
    %v1142 = vadd.f32 %v828, %v1141
    %1143 = vmatprep.mubr.f32.mxu0 0.0
    %1144 = vmatmul.mubr.f32.gmra.mrb[0].mxu0 %v840
    %v1145 = vpop.f32.mrb[0].mxu0
    %v1146 = vadd.f32 %v833, %v1145
    %v1147 = vpop.f32.mrb[0].mxu0
    %v1148 = vadd.f32 %v833, %v1147
    %1149 = vdwg.mxu0
    %vm1150 = vcmp.gt.f32.partialorder %v909, 0.0
    %vm1151 = vcmp.gt.f32.partialorder %v911, 0.0
    %vm1152 = vcmp.gt.f32.partialorder %v986, 0.0
    %vm1153 = vcmp.gt.f32.partialorder %v988, 0.0
    %vm1154 = vcmp.gt.f32.partialorder %v1063, 0.0
    %vm1155 = vcmp.gt.f32.partialorder %v1065, 0.0
    %vm1156 = vcmp.gt.f32.partialorder %v1140, 0.0
    %vm1157 = vcmp.gt.f32.partialorder %v1142, 0.0
    %vm1158 = vcmp.gt.f32.partialorder %v915, 0.0
    %vm1159 = vcmp.gt.f32.partialorder %v917, 0.0
    %vm1160 = vcmp.gt.f32.partialorder %v992, 0.0
    %vm1161 = vcmp.gt.f32.partialorder %v994, 0.0
    %vm1162 = vcmp.gt.f32.partialorder %v1069, 0.0
    %vm1163 = vcmp.gt.f32.partialorder %v1071, 0.0
    %vm1164 = vcmp.gt.f32.partialorder %v1146, 0.0
    %vm1165 = vcmp.gt.f32.partialorder %v1148, 0.0
    %v1166 = vmul.f32 %v909, 0.2
    %v1167 = vmul.f32 %v911, 0.2
    %v1168 = vmul.f32 %v986, 0.2
    %v1169 = vmul.f32 %v988, 0.2
    %v1170 = vmul.f32 %v1063, 0.2
    %v1171 = vmul.f32 %v1065, 0.2
    %v1172 = vmul.f32 %v1140, 0.2
    %v1173 = vmul.f32 %v1142, 0.2
    %v1174 = vmul.f32 %v915, 0.2
    %v1175 = vmul.f32 %v917, 0.2
    %v1176 = vmul.f32 %v992, 0.2
    %v1177 = vmul.f32 %v994, 0.2
    %v1178 = vmul.f32 %v1069, 0.2
    %v1179 = vmul.f32 %v1071, 0.2
    %v1180 = vmul.f32 %v1146, 0.2
    %v1181 = vmul.f32 %v1148, 0.2
    %v1182 = vsel %vm1150, %v909, %v1166
    %v1183 = vsel %vm1151, %v911, %v1167
    %v1184 = vsel %vm1152, %v986, %v1168
    %v1185 = vsel %vm1153, %v988, %v1169
    %v1186 = vsel %vm1154, %v1063, %v1170
    %v1187 = vsel %vm1155, %v1065, %v1171
    %v1188 = vsel %vm1156, %v1140, %v1172
    %v1189 = vsel %vm1157, %v1142, %v1173
    %v1190 = vsel %vm1158, %v915, %v1174
    %v1191 = vsel %vm1159, %v917, %v1175
    %v1192 = vsel %vm1160, %v992, %v1176
    %v1193 = vsel %vm1161, %v994, %v1177
    %v1194 = vsel %vm1162, %v1069, %v1178
    %v1195 = vsel %vm1163, %v1071, %v1179
    %v1196 = vsel %vm1164, %v1146, %v1180
    %v1197 = vsel %vm1165, %v1148, %v1181
    %v1198 = vadd.f32 %v1182, %v368
    %v1199 = vadd.f32 %v1183, %v370
    %v1200 = vadd.f32 %v1184, %v457
    %v1201 = vadd.f32 %v1185, %v459
    %v1202 = vadd.f32 %v1186, %v546
    %v1203 = vadd.f32 %v1187, %v548
    %v1204 = vadd.f32 %v1188, %v635
    %v1205 = vadd.f32 %v1189, %v637
    %v1206 = vadd.f32 %v1190, %v374
    %v1207 = vadd.f32 %v1191, %v376
    %v1208 = vadd.f32 %v1192, %v463
    %v1209 = vadd.f32 %v1193, %v465
    %v1210 = vadd.f32 %v1194, %v552
    %v1211 = vadd.f32 %v1195, %v554
    %v1212 = vadd.f32 %v1196, %v641
    %v1213 = vadd.f32 %v1197, %v643
    %v1214 = vmax.f32 %v1198, 0.0
    %v1215 = vmax.f32 %v1199, 0.0
    %v1216 = vmax.f32 %v1200, 0.0
    %v1217 = vmax.f32 %v1201, 0.0
    %v1218 = vmax.f32 %v1202, 0.0
    %v1219 = vmax.f32 %v1203, 0.0
    %v1220 = vmax.f32 %v1204, 0.0
    %v1221 = vmax.f32 %v1205, 0.0
    %v1222 = vmax.f32 %v1206, 0.0
    %v1223 = vmax.f32 %v1207, 0.0
    %v1224 = vmax.f32 %v1208, 0.0
    %v1225 = vmax.f32 %v1209, 0.0
    %v1226 = vmax.f32 %v1210, 0.0
    %v1227 = vmax.f32 %v1211, 0.0
    %v1228 = vmax.f32 %v1212, 0.0
    %v1229 = vmax.f32 %v1213, 0.0
    %1230 = vst [vmem:[#allocation2] sm:$0xff] %v1214
    %1231 = vst [vmem:[#allocation2 + $0x8] sm:$0xff] %v1215
    %1232 = vst [vmem:[#allocation2 + $0x10] sm:$0xff] %v1216
    %1233 = vst [vmem:[#allocation2 + $0x18] sm:$0xff] %v1217
    %1234 = vst [vmem:[#allocation2 + $0x20] sm:$0xff] %v1218
    %1235 = vst [vmem:[#allocation2 + $0x28] sm:$0xff] %v1219
    %1236 = vst [vmem:[#allocation2 + $0x30] sm:$0xff] %v1220
    %1237 = vst [vmem:[#allocation2 + $0x38] sm:$0xff] %v1221
    %1238 = vst [vmem:[#allocation2 + $0x40] sm:$0xff] %v1222
    %1239 = vst [vmem:[#allocation2 + $0x48] sm:$0xff] %v1223
    %1240 = vst [vmem:[#allocation2 + $0x50] sm:$0xff] %v1224
    %1241 = vst [vmem:[#allocation2 + $0x58] sm:$0xff] %v1225
    %1242 = vst [vmem:[#allocation2 + $0x60] sm:$0xff] %v1226
    %1243 = vst [vmem:[#allocation2 + $0x68] sm:$0xff] %v1227
    %1244 = vst [vmem:[#allocation2 + $0x70] sm:$0xff] %v1228
    %1245 = vst [vmem:[#allocation2 + $0x78] sm:$0xff] %v1229
    // Predicated region
    $region22: #{tpu_custom_call.1} parent=1 // pred_check
      _
    $region23: #{tpu_custom_call.1} parent=1 // pred_check_branch
      %1247 = sbr.rel (0) target = $region25
    $region24: #{tpu_custom_call.1} parent=1 // pred_region
      %s1249 = ssub.s32 2048, 2048
      %1250 = vsyncadd [#allocation3], %s1249
      %s1251 = sshll.u32 [#allocation2], 4
      %s1252 = int_to_ptr.vmem [resolvable:$true] %s1251
      %1257 = dma.vmem_to_hbm [thread:$0]  %s1252, 2048, %s5, [#allocation3], 1024, 1024, 64
    $region25: #{tpu_custom_call.1} parent=1 // pred_fallthru
      _
    // Predicated region
    $region26: #{tpu_custom_call.1} parent=1 // pred_check
      _
    $region27: #{tpu_custom_call.1} parent=1 // pred_check_branch
      %1259 = sbr.rel (0) target = $region29
    $region28: #{tpu_custom_call.1} parent=1 // pred_region
      %1260 = dma.done [#allocation3], 2048
    $region29: #{tpu_custom_call.1} parent=1 // pred_fallthru
      _
    %1261 = vsyncpa [#allocation3], 1

</llo_original>
